<compile_context>
chip_gen: v6e
topology: v6e:2x2x1
jax: 0.10.0
libtpu: 0.0.40
codegen_flags: <defaults>
</compile_context>

<pallas_src>
import functools

import jax
import jax.numpy as jnp
from jax import lax
from jax.experimental import pallas as pl
from jax.experimental.pallas import tpu as pltpu

EPS = 1e-5
LANE = 128


def _linear_bn_relu_kernel(x_ref, w_ref, gb_ref, o_ref, acc_ref, *, inv_n):
    k = pl.program_id(1)

    @pl.when(k == 0)
    def _():
        acc_ref[...] = jnp.zeros_like(acc_ref)

    # FC without bias (a per-feature constant is cancelled by the BN mean
    # subtraction).  Contract axis 1 of x with axis 1 of w -> (N_p, tn);
    # no explicit transpose of the weight tile.  f32 accumulation on the MXU.
    acc_ref[...] += lax.dot_general(
        x_ref[...], w_ref[...],
        dimension_numbers=(((1,), (1,)), ((), ())),
        preferred_element_type=jnp.float32,
    )

    @pl.when(k == pl.num_programs(1) - 1)
    def _():
        y = acc_ref[...]                                   # (N_p, tn) f32
        gamma = gb_ref[0:1, :].astype(jnp.float32)         # (1, tn)
        beta = gb_ref[1:2, :].astype(jnp.float32)

        # BatchNorm1d training semantics: biased batch statistics over axis 0.
        # Zero-padded batch rows contribute 0 to both sums; inv_n is 1/true_N.
        mean = jnp.sum(y, axis=0, keepdims=True) * inv_n
        ex2 = jnp.sum(y * y, axis=0, keepdims=True) * inv_n
        var = jnp.maximum(ex2 - mean * mean, 0.0)

        scale = gamma * lax.rsqrt(var + EPS)               # tiny EUP op
        shift = beta - mean * scale

        out = y * scale + shift                            # fused norm + affine
        o_ref[...] = jnp.maximum(out, 0.0).astype(o_ref.dtype)   # ReLU, one store


def _pad_to(n, m):
    return ((n + m - 1) // m) * m


def _pick_tile(padded, candidates):
    for c in candidates:
        if padded >= c and padded % c == 0:
            return c
    return padded


def linear_block(x, weight, bias, gamma, beta, *,
                 matmul_dtype=jnp.bfloat16, out_dtype=None):
    """LinearBlock forward.

    x: (N, Cin) f32; weight: (Cout, Cin); bias/gamma/beta: (Cout,).
    `bias` is accepted for API parity with nn.Linear but is mathematically
    cancelled by training-mode BatchNorm (mean subtraction), so it is not
    passed to the kernel (this also makes the zero batch-padding exact).
    """
    del bias
    n, cin = x.shape
    cout = weight.shape[0]
    out_dtype = x.dtype if out_dtype is None else out_dtype

    mm_bytes = jnp.dtype(matmul_dtype).itemsize
    sub = 8 * (4 // mm_bytes)                 # 8 rows for f32 operands, 16 for bf16

    n_p = _pad_to(n, sub)
    cin_p = _pad_to(cin, LANE)
    cout_p = _pad_to(cout, LANE)

    tn = _pick_tile(cout_p, (256, 128))       # 256-wide output tiles for v6e/v7x MXU
    tk = _pick_tile(cin_p, (512, 256, 128))

    # Lane/sublane-dense zero padding + operand dtype cast in the wrapper
    # (halves DMA + VMEM for the bf16 path; no in-kernel cast pass).
    x_p = jnp.pad(x, ((0, n_p - n), (0, cin_p - cin))).astype(matmul_dtype)
    w_p = jnp.pad(weight, ((0, cout_p - cout), (0, cin_p - cin))).astype(matmul_dtype)
    gb = jnp.pad(jnp.stack([gamma, beta], axis=0),
                 ((0, 0), (0, cout_p - cout))).astype(jnp.float32)

    # Per-tile working set: double-buffered inputs/output + f32 accumulator,
    # plus headroom; capped well below the v7x 64 MiB physical VMEM.
    out_bytes = jnp.dtype(out_dtype).itemsize
    tile_bytes = (
        2 * (n_p * tk * mm_bytes)        # x tile, double-buffered
        + 2 * (tn * tk * mm_bytes)       # w tile, double-buffered
        + 2 * (2 * tn * 4)               # gamma/beta tile
        + 2 * (n_p * tn * out_bytes)     # out tile
        + n_p * tn * 4                   # accumulator scratch
    )
    vmem_limit = int(min(max(tile_bytes + (8 << 20), 16 << 20), 48 << 20))

    out_p = pl.pallas_call(
        functools.partial(_linear_bn_relu_kernel, inv_n=1.0 / float(n)),
        out_shape=jax.ShapeDtypeStruct((n_p, cout_p), out_dtype),
        grid_spec=pltpu.PrefetchScalarGridSpec(
            num_scalar_prefetch=0,
            grid=(cout_p // tn, cin_p // tk),            # (Cout tiles, Cin tiles)
            in_specs=[
                pl.BlockSpec((n_p, tk), lambda j, k: (0, k)),   # x (re-used per Cout tile)
                pl.BlockSpec((tn, tk), lambda j, k: (j, k)),    # weight
                pl.BlockSpec((2, tn), lambda j, k: (0, j)),     # [gamma; beta]
            ],
            out_specs=pl.BlockSpec((n_p, tn), lambda j, k: (0, j)),  # resident across k
            scratch_shapes=[pltpu.VMEM((n_p, tn), jnp.float32)],
        ),
        compiler_params=pltpu.CompilerParams(
            dimension_semantics=("parallel", "arbitrary"),
            vmem_limit_bytes=vmem_limit,
        ),
    )(x_p, w_p, gb)

    return out_p[:n, :cout]


def reference(x, weight, bias, gamma, beta):
    y = x @ weight.T + bias
    mean = jnp.mean(y, axis=0, keepdims=True)
    var = jnp.mean((y - mean) ** 2, axis=0, keepdims=True)
    y_hat = (y - mean) / jnp.sqrt(var + EPS)
    return jnp.maximum(gamma * y_hat + beta, 0.0)


if __name__ == "__main__":
    key = jax.random.PRNGKey(0)
    k_x, k_w, k_b = jax.random.split(key, 3)

    N, C_IN, C_OUT = 8, 32, 16

    x = jax.random.normal(k_x, (N, C_IN), dtype=jnp.float32)

    # PyTorch-Linear-style uniform init bounds; BN affine init gamma=1, beta=0.
    bound = 1.0 / jnp.sqrt(jnp.float32(C_IN))
    weight = jax.random.uniform(k_w, (C_OUT, C_IN), jnp.float32, -bound, bound)
    bias = jax.random.uniform(k_b, (C_OUT,), jnp.float32, -bound, bound)
    gamma = jnp.ones((C_OUT,), jnp.float32)
    beta = jnp.zeros((C_OUT,), jnp.float32)

    ref = reference(x, weight, bias, gamma, beta)

    # f32 MXU operands: tight correctness check.
    out_f32 = linear_block(x, weight, bias, gamma, beta, matmul_dtype=jnp.float32)
    jax.block_until_ready(out_f32)
    assert out_f32.shape == (N, C_OUT)
    assert jnp.allclose(out_f32, ref, atol=1e-4, rtol=1e-4), "f32 mismatch vs reference"

    # bf16 MXU operands (v6e/v7x fast path), f32 accumulate + f32 BN/ReLU.
    out_bf16 = linear_block(x, weight, bias, gamma, beta, matmul_dtype=jnp.bfloat16)
    jax.block_until_ready(out_bf16)
    assert out_bf16.shape == (N, C_OUT)
    assert jnp.allclose(out_bf16, ref, atol=3e-2, rtol=3e-2), "bf16 mismatch vs reference"

    print("KERNEL_OK")
</pallas_src>

<mosaic_0001>
module attributes {stable_mosaic.version = 11 : i64} {
  func.func @_linear_bn_relu_kernel(%arg0: i32, %arg1: i32, %arg2: memref<8x128xf32, #tpu.memory_space<vmem>>, %arg3: memref<128x128xf32, #tpu.memory_space<vmem>>, %arg4: memref<2x128xf32, #tpu.memory_space<vmem>>, %arg5: memref<8x128xf32, #tpu.memory_space<vmem>>, %arg6: memref<8x128xf32, #tpu.memory_space<vmem>>) attributes {dimension_semantics = [#tpu.dimension_semantics<parallel>, #tpu.dimension_semantics<arbitrary>], iteration_bounds = array<i64: 1, 1>, scalar_prefetch = 0 : i64, scratch_operands = 1 : i64, tpu.core_type = #tpu.core_type<tc>, window_params = [{transform_indices = @transform_0, window_bounds = array<i64: 8, 128>}, {transform_indices = @transform_1, window_bounds = array<i64: 128, 128>}, {transform_indices = @transform_2, window_bounds = array<i64: 2, 128>}, {transform_indices = @transform_3, window_bounds = array<i64: 8, 128>}]} {
    %c0_i32 = arith.constant 0 : i32
    %0 = arith.cmpi eq, %arg1, %c0_i32 : i32
    %1 = arith.extui %0 : i1 to i32
    %c0_i32_0 = arith.constant 0 : i32
    %2 = arith.cmpi ne, %1, %c0_i32_0 : i32
    scf.if %2 {
      %cst_10 = arith.constant 0.000000e+00 : f32
      %12 = vector.broadcast %cst_10 : f32 to vector<8x128xf32>
      %c0_11 = arith.constant 0 : index
      %c0_12 = arith.constant 0 : index
      %13 = vector.load %arg6[%c0_11, %c0_12] : memref<8x128xf32, #tpu.memory_space<vmem>>, vector<8x128xf32>
      tpu.vector_store %arg6[%c0_11, %c0_12], %12 {strides = array<i32>} : memref<8x128xf32, #tpu.memory_space<vmem>>, vector<8x128xf32>,
    } else {
    }
    %c0 = arith.constant 0 : index
    %c0_1 = arith.constant 0 : index
    %3 = vector.load %arg6[%c0, %c0_1] : memref<8x128xf32, #tpu.memory_space<vmem>>, vector<8x128xf32>
    %c0_2 = arith.constant 0 : index
    %c0_3 = arith.constant 0 : index
    %4 = vector.load %arg2[%c0_2, %c0_3] : memref<8x128xf32, #tpu.memory_space<vmem>>, vector<8x128xf32>
    %c0_4 = arith.constant 0 : index
    %c0_5 = arith.constant 0 : index
    %5 = vector.load %arg3[%c0_4, %c0_5] : memref<128x128xf32, #tpu.memory_space<vmem>>, vector<128x128xf32>
    %cst = arith.constant dense<0.000000e+00> : vector<8x128xf32>
    %6 = tpu.matmul %4, %5, %cst {dimension_numbers = #tpu.dot_dimension_numbers<[1], [1], [0], [0], [0, 0, 1, 0], [], []>} : vector<8x128xf32>, vector<128x128xf32>, vector<8x128xf32> -> vector<8x128xf32>
    %7 = arith.addf %3, %6 : vector<8x128xf32>
    %c0_6 = arith.constant 0 : index
    %c0_7 = arith.constant 0 : index
    %8 = vector.load %arg6[%c0_6, %c0_7] : memref<8x128xf32, #tpu.memory_space<vmem>>, vector<8x128xf32>
    tpu.vector_store %arg6[%c0_6, %c0_7], %7 {strides = array<i32>} : memref<8x128xf32, #tpu.memory_space<vmem>>, vector<8x128xf32>,
    %c0_i32_8 = arith.constant 0 : i32
    %9 = arith.cmpi eq, %arg1, %c0_i32_8 : i32
    %10 = arith.extui %9 : i1 to i32
    %c0_i32_9 = arith.constant 0 : i32
    %11 = arith.cmpi ne, %10, %c0_i32_9 : i32
    scf.if %11 {
      %c0_10 = arith.constant 0 : index
      %c0_11 = arith.constant 0 : index
      %12 = vector.load %arg6[%c0_10, %c0_11] : memref<8x128xf32, #tpu.memory_space<vmem>>, vector<8x128xf32>
      %c0_12 = arith.constant 0 : index
      %c0_13 = arith.constant 0 : index
      %13 = vector.load %arg4[%c0_12, %c0_13] : memref<2x128xf32, #tpu.memory_space<vmem>>, vector<1x128xf32>
      %c1 = arith.constant 1 : index
      %c0_14 = arith.constant 0 : index
      %14 = vector.load %arg4[%c1, %c0_14] : memref<2x128xf32, #tpu.memory_space<vmem>>, vector<1x128xf32>
      %cst_15 = arith.constant dense<0.000000e+00> : vector<128xf32>
      %15 = vector.multi_reduction <add>, %12, %cst_15 [0] : vector<8x128xf32> to vector<128xf32>
      %16 = vector.shape_cast %15 : vector<128xf32> to vector<1x128xf32>
      %cst_16 = arith.constant 1.250000e-01 : f32
      %17 = vector.broadcast %cst_16 : f32 to vector<1x128xf32>
      %18 = arith.mulf %16, %17 : vector<1x128xf32>
      %19 = arith.mulf %12, %12 : vector<8x128xf32>
      %cst_17 = arith.constant dense<0.000000e+00> : vector<128xf32>
      %20 = vector.multi_reduction <add>, %19, %cst_17 [0] : vector<8x128xf32> to vector<128xf32>
      %21 = vector.shape_cast %20 : vector<128xf32> to vector<1x128xf32>
      %cst_18 = arith.constant 1.250000e-01 : f32
      %22 = vector.broadcast %cst_18 : f32 to vector<1x128xf32>
      %23 = arith.mulf %21, %22 : vector<1x128xf32>
      %24 = arith.mulf %18, %18 : vector<1x128xf32>
      %25 = arith.subf %23, %24 : vector<1x128xf32>
      %cst_19 = arith.constant 0.000000e+00 : f32
      %26 = vector.broadcast %cst_19 : f32 to vector<1x128xf32>
      %27 = arith.maximumf %25, %26 : vector<1x128xf32>
      %cst_20 = arith.constant 9.99999974E-6 : f32
      %28 = vector.broadcast %cst_20 : f32 to vector<1x128xf32>
      %29 = arith.addf %27, %28 : vector<1x128xf32>
      %30 = math.rsqrt %29 : vector<1x128xf32>
      %31 = arith.mulf %13, %30 : vector<1x128xf32>
      %32 = arith.mulf %18, %31 : vector<1x128xf32>
      %33 = arith.subf %14, %32 : vector<1x128xf32>
      %34 = vector.broadcast %31 : vector<1x128xf32> to vector<8x128xf32>
      %35 = arith.mulf %12, %34 : vector<8x128xf32>
      %36 = vector.broadcast %33 : vector<1x128xf32> to vector<8x128xf32>
      %37 = arith.addf %35, %36 : vector<8x128xf32>
      %cst_21 = arith.constant 0.000000e+00 : f32
      %38 = vector.broadcast %cst_21 : f32 to vector<8x128xf32>
      %39 = arith.maximumf %37, %38 : vector<8x128xf32>
      %c0_22 = arith.constant 0 : index
      %c0_23 = arith.constant 0 : index
      %40 = vector.load %arg5[%c0_22, %c0_23] : memref<8x128xf32, #tpu.memory_space<vmem>>, vector<8x128xf32>
      tpu.vector_store %arg5[%c0_22, %c0_23], %39 {strides = array<i32>} : memref<8x128xf32, #tpu.memory_space<vmem>>, vector<8x128xf32>,
    } else {
    }
    return
  }
  func.func @transform_0(%arg0: i32, %arg1: i32) -> (i32, i32) {
    %c0_i32 = arith.constant 0 : i32
    %c0_i32_0 = arith.constant 0 : i32
    return %c0_i32, %arg1 : i32, i32
  }
  func.func @transform_1(%arg0: i32, %arg1: i32) -> (i32, i32) {
    %c0_i32 = arith.constant 0 : i32
    return %arg0, %arg1 : i32, i32
  }
  func.func @transform_2(%arg0: i32, %arg1: i32) -> (i32, i32) {
    %c0_i32 = arith.constant 0 : i32
    %c0_i32_0 = arith.constant 0 : i32
    return %c0_i32, %arg0 : i32, i32
  }
  func.func @transform_3(%arg0: i32, %arg1: i32) -> (i32, i32) {
    %c0_i32 = arith.constant 0 : i32
    %c0_i32_0 = arith.constant 0 : i32
    return %c0_i32, %arg0 : i32, i32
  }
}

</mosaic_0001>

<llo_original>
// kernel: tpu_custom_call.1
$region0: #{tpu_custom_call.1}
  #allocation0 [shape = 'u32[]', space=smem, size = 0x4, offset = 0x4, fixed_abs, tag = 'smem constant byte address 0x4 - core index']
  #allocation1 [shape = 'u32[144,128]{1,0:T(1,128)}', space=vmem, size = 0x12000, scoped, tag = 'internal scratch']
  #allocation2 [shape = 'f32[8,128]{1,0:T(8,128)}', space=vmem, size = 0x1000, scoped, tag = 'scratch operand']
  %s0 = inlined_call_operand.hbm [shape: f32[8,128], index: 0, kind: input, shape index: {}]
  %s1 = inlined_call_operand.hbm [shape: f32[128,128], index: 1, kind: input, shape index: {}]
  %s2 = inlined_call_operand.vmem [shape: f32[2,128], index: 2, kind: input, shape index: {}]
  %s3 = inlined_call_operand.hbm [shape: f32[8,128], index: 3, kind: output, shape index: {}]
  %s4 = sld [smem:[#allocation0]]
  $region38: #{tpu_custom_call.1} parent=0
    _
  %s6 = ssub.s32 1, %s4
  %s7 = scalar_select 0, %s6, %s4
  $region1: #{tpu_custom_call.1} parent=0
    #allocation3 [shape = 'u8[4096]{0}', space=vmem, size = 0x1000, scoped, tag = 'input window, operand 0, single buffered']
    #allocation4 [shape = 's32[1]{0}', space=sflag, size = 0x4, scoped, tag = 'scoped memory for tpu_custom_call.1']
    #allocation5 [shape = 's32[1]{0}', space=sflag, size = 0x4, scoped, tag = 'scoped memory for tpu_custom_call.1']
    #allocation6 [shape = 'u8[65536]{0}', space=vmem, size = 0x10000, scoped, tag = 'input window, operand 1, single buffered']
    #allocation7 [shape = 's32[1]{0}', space=sflag, size = 0x4, scoped, tag = 'scoped memory for tpu_custom_call.1']
    #allocation8 [shape = 'u8[4096]{0}', space=vmem, size = 0x1000, scoped, tag = 'output window, operand 0, single buffered']
    %8 = vsyncpa [#allocation4], 0
    %9 = vsyncpa [#allocation7], 0
    %10 = vsyncpa [#allocation5], 0
    // Predicated region
    $region2: #{tpu_custom_call.1} parent=1 // pred_check
      _
    $region3: #{tpu_custom_call.1} parent=1 // pred_check_branch
      %12 = sbr.rel (0) target = $region5
    $region4: #{tpu_custom_call.1} parent=1 // pred_region
      %s14 = ssub.s32 128, 128
      %15 = vsyncadd [#allocation4], %s14
      %s17 = sshll.u32 [#allocation3], 4
      %s18 = int_to_ptr.vmem [resolvable:$true] %s17
      %20 = dma.hbm_to_vmem [thread:$0]  %s0, 128, %s18, [#allocation4]
    $region5: #{tpu_custom_call.1} parent=1 // pred_fallthru
      _
    // Predicated region
    $region6: #{tpu_custom_call.1} parent=1 // pred_check
      _
    $region7: #{tpu_custom_call.1} parent=1 // pred_check_branch
      %22 = sbr.rel (0) target = $region9
    $region8: #{tpu_custom_call.1} parent=1 // pred_region
      %s24 = ssub.s32 2048, 2048
      %25 = vsyncadd [#allocation7], %s24
      %s26 = sshll.u32 [#allocation6], 4
      %s27 = int_to_ptr.vmem [resolvable:$true] %s26
      %32 = dma.hbm_to_vmem [thread:$0]  %s1, 2048, %s27, [#allocation7], 128, 128, 8
    $region9: #{tpu_custom_call.1} parent=1 // pred_fallthru
      _
    // Predicated region
    $region10: #{tpu_custom_call.1} parent=1 // pred_check
      _
    $region11: #{tpu_custom_call.1} parent=1 // pred_check_branch
      %34 = sbr.rel (0) target = $region13
    $region12: #{tpu_custom_call.1} parent=1 // pred_region
      _
    $region13: #{tpu_custom_call.1} parent=1 // pred_fallthru
      _
    // Predicated region
    $region14: #{tpu_custom_call.1} parent=1 // pred_check
      _
    $region15: #{tpu_custom_call.1} parent=1 // pred_check_branch
      %36 = sbr.rel (0) target = $region17
    $region16: #{tpu_custom_call.1} parent=1 // pred_region
      %37 = dma.done [#allocation4], 128
    $region17: #{tpu_custom_call.1} parent=1 // pred_fallthru
      _
    // Predicated region
    $region18: #{tpu_custom_call.1} parent=1 // pred_check
      _
    $region19: #{tpu_custom_call.1} parent=1 // pred_check_branch
      %39 = sbr.rel (0) target = $region21
    $region20: #{tpu_custom_call.1} parent=1 // pred_region
      %40 = dma.done [#allocation7], 2048
    $region21: #{tpu_custom_call.1} parent=1 // pred_fallthru
      _
    %p41 = scmp.eq.s32.totalorder 0, 0
    // Predicated region
    $region22: #{tpu_custom_call.1} parent=1 // pred_check
      %p42 = pneg %p41
    $region23: #{tpu_custom_call.1} parent=1 // pred_check_branch
      %44 = sbr.rel (%p42) target = $region25
    $region24: #{tpu_custom_call.1} parent=1 // pred_region
      %45 = vst [vmem:[#allocation2] sm:$0xff] 0.0
    $region25: #{tpu_custom_call.1} parent=1 // pred_fallthru
      _
    %v46 = vld [vmem:[#allocation2] sm:$0xff]
    %v47 = vld [vmem:[#allocation3] sm:$0xff]
    %v48 = vld [vmem:[#allocation6] sm:$0xff]
    %v49 = vld [vmem:[#allocation6 + $0x8] sm:$0xff]
    %v50 = vld [vmem:[#allocation6 + $0x10] sm:$0xff]
    %v51 = vld [vmem:[#allocation6 + $0x18] sm:$0xff]
    %v52 = vld [vmem:[#allocation6 + $0x20] sm:$0xff]
    %v53 = vld [vmem:[#allocation6 + $0x28] sm:$0xff]
    %v54 = vld [vmem:[#allocation6 + $0x30] sm:$0xff]
    %v55 = vld [vmem:[#allocation6 + $0x38] sm:$0xff]
    %v56 = vld [vmem:[#allocation6 + $0x40] sm:$0xff]
    %v57 = vld [vmem:[#allocation6 + $0x48] sm:$0xff]
    %v58 = vld [vmem:[#allocation6 + $0x50] sm:$0xff]
    %v59 = vld [vmem:[#allocation6 + $0x58] sm:$0xff]
    %v60 = vld [vmem:[#allocation6 + $0x60] sm:$0xff]
    %v61 = vld [vmem:[#allocation6 + $0x68] sm:$0xff]
    %v62 = vld [vmem:[#allocation6 + $0x70] sm:$0xff]
    %v63 = vld [vmem:[#allocation6 + $0x78] sm:$0xff]
    %64 = vmatprep.subr.mxu0 0.0
    %65 = vmatpush1.xpose.msra.mxu0 %v63
    %66 = vmatprep.subr.mxu0 0.0
    %67 = vmatpush1.xpose.msra.mxu0 %v62
    %68 = vmatprep.subr.mxu0 0.0
    %69 = vmatpush1.xpose.msra.mxu0 %v61
    %70 = vmatprep.subr.mxu0 0.0
    %71 = vmatpush1.xpose.msra.mxu0 %v60
    %72 = vmatprep.subr.mxu0 0.0
    %73 = vmatpush1.xpose.msra.mxu0 %v59
    %74 = vmatprep.subr.mxu0 0.0
    %75 = vmatpush1.xpose.msra.mxu0 %v58
    %76 = vmatprep.subr.mxu0 0.0
    %77 = vmatpush1.xpose.msra.mxu0 %v57
    %78 = vmatprep.subr.mxu0 0.0
    %79 = vmatpush1.xpose.msra.mxu0 %v56
    %80 = vmatprep.subr.mxu0 0.0
    %81 = vmatpush1.xpose.msra.mxu0 %v55
    %82 = vmatprep.subr.mxu0 0.0
    %83 = vmatpush1.xpose.msra.mxu0 %v54
    %84 = vmatprep.subr.mxu0 0.0
    %85 = vmatpush1.xpose.msra.mxu0 %v53
    %86 = vmatprep.subr.mxu0 0.0
    %87 = vmatpush1.xpose.msra.mxu0 %v52
    %88 = vmatprep.subr.mxu0 0.0
    %89 = vmatpush1.xpose.msra.mxu0 %v51
    %90 = vmatprep.subr.mxu0 0.0
    %91 = vmatpush1.xpose.msra.mxu0 %v50
    %92 = vmatprep.subr.mxu0 0.0
    %93 = vmatpush1.xpose.msra.mxu0 %v49
    %94 = vmatprep.subr.mxu0 0.0
    %95 = vmatpush1.xpose.msra.mxu0 %v48
    %96 = vmatprep.subr.mxu0 0.0
    %97 = vmatpush2.xpose.msra.mxu0 0.0
    %98 = vmatprep.subr.mxu0 0.0
    %99 = vmatpush2.xpose.msra.mxu0 0.0
    %100 = vmatprep.subr.mxu0 0.0
    %101 = vmatpush2.xpose.msra.mxu0 0.0
    %102 = vmatprep.subr.mxu0 0.0
    %103 = vmatpush2.xpose.msra.mxu0 0.0
    %104 = vmatprep.subr.mxu0 0.0
    %105 = vmatpush2.xpose.msra.mxu0 0.0
    %106 = vmatprep.subr.mxu0 0.0
    %107 = vmatpush2.xpose.msra.mxu0 0.0
    %108 = vmatprep.subr.mxu0 0.0
    %109 = vmatpush2.xpose.msra.mxu0 0.0
    %110 = vmatprep.subr.mxu0 0.0
    %111 = vmatpush2.xpose.msra.mxu0 0.0
    %112 = vmatprep.subr.mxu0 0.0
    %113 = vmatpush2.xpose.msra.mxu0 0.0
    %114 = vmatprep.subr.mxu0 0.0
    %115 = vmatpush2.xpose.msra.mxu0 0.0
    %116 = vmatprep.subr.mxu0 0.0
    %117 = vmatpush2.xpose.msra.mxu0 0.0
    %118 = vmatprep.subr.mxu0 0.0
    %119 = vmatpush2.xpose.msra.mxu0 0.0
    %120 = vmatprep.subr.mxu0 0.0
    %121 = vmatpush2.xpose.msra.mxu0 0.0
    %122 = vmatprep.subr.mxu0 0.0
    %123 = vmatpush2.xpose.msra.mxu0 0.0
    %124 = vmatprep.subr.mxu0 0.0
    %125 = vmatpush2.xpose.msra.mxu0 0.0
    %126 = vmatprep.subr.mxu0 0.0
    %127 = vmatpush2.xpose.msra.mxu0 0.0
    %128 = vmatprep.mubr.f32.mxu0 0.0
    %129 = vmatmul.mubr.f32.gmra.mxu0 %v47
    %v130 = vpop.f32.mrf.mxu0
    %v131 = vadd.f32 0.0, %v130
    %v132 = vpop.f32.mrf.mxu0
    %133 = vdwg.mxu0
    %v134 = vadd.f32 %v46, %v131
    %135 = vst [vmem:[#allocation2] sm:$0xff] %v134
    // Predicated region
    $region26: #{tpu_custom_call.1} parent=1 // pred_check
      %p136 = pneg %p41
    $region27: #{tpu_custom_call.1} parent=1 // pred_check_branch
      %138 = sbr.rel (%p136) target = $region29
    $region28: #{tpu_custom_call.1} parent=1 // pred_region
      %v139 = vld [vmem:[#allocation2] sm:$0xff]
      %v140 = vld [vmem:[%s2] sm:$0x1]
      %v141 = vld [vmem:[%s2 + $0x1] sm:$0x1]
      %v142 = vrot.slane %v139, 4
      %v143 = vadd.f32 %v139, %v142
      %v144 = vrot.slane %v143, 2
      %v145 = vadd.f32 %v143, %v144
      %v146 = vrot.slane %v145, 1
      %v147 = vadd.f32 %v145, %v146
      %v148 = vmul.f32 %v147, 0.125
      %v149 = vmul.f32 %v139, %v139
      %v150 = vrot.slane %v149, 4
      %v151 = vadd.f32 %v149, %v150
      %v152 = vrot.slane %v151, 2
      %v153 = vadd.f32 %v151, %v152
      %v154 = vrot.slane %v153, 1
      %v155 = vadd.f32 %v153, %v154
      %v156 = vmul.f32 %v155, 0.125
      %v157 = vmul.f32 %v148, %v148
      %v158 = vsub.f32 %v156, %v157
      %v159 = vmax.f32 %v158, 0.0
      %v160 = vadd.f32 %v159, 1e-05
      %v161 = vrsqrt.pop %v160
      %v162 = vmul.f32 %v140, %v161
      %v163 = vmul.f32 %v148, %v162
      %v164 = vsub.f32 %v141, %v163
      %v165 = vlaneseq
      %v166 = vshrl.u32 %v165, 7
      %v167 = vsub.s32 0, %v166
      %v168 = vrot.slane %v162, %v167
      %v169 = vmul.f32 %v139, %v168
      %v170 = vlaneseq
      %v171 = vshrl.u32 %v170, 7
      %v172 = vsub.s32 0, %v171
      %v173 = vrot.slane %v164, %v172
      %v174 = vadd.f32 %v169, %v173
      %v175 = vmax.f32 %v174, 0.0
      %176 = vst [vmem:[#allocation8] sm:$0xff] %v175
    $region29: #{tpu_custom_call.1} parent=1 // pred_fallthru
      _
    // Predicated region
    $region30: #{tpu_custom_call.1} parent=1 // pred_check
      _
    $region31: #{tpu_custom_call.1} parent=1 // pred_check_branch
      %178 = sbr.rel (0) target = $region33
    $region32: #{tpu_custom_call.1} parent=1 // pred_region
      %s180 = ssub.s32 128, 128
      %181 = vsyncadd [#allocation5], %s180
      %s183 = sshll.u32 [#allocation8], 4
      %s184 = int_to_ptr.vmem [resolvable:$true] %s183
      %186 = dma.vmem_to_hbm [thread:$0]  %s184, 128, %s3, [#allocation5]
    $region33: #{tpu_custom_call.1} parent=1 // pred_fallthru
      _
    // Predicated region
    $region34: #{tpu_custom_call.1} parent=1 // pred_check
      _
    $region35: #{tpu_custom_call.1} parent=1 // pred_check_branch
      %188 = sbr.rel (0) target = $region37
    $region36: #{tpu_custom_call.1} parent=1 // pred_region
      %189 = dma.done [#allocation5], 128
    $region37: #{tpu_custom_call.1} parent=1 // pred_fallthru
      _
    %190 = vsyncpa [#allocation4], 1
    %191 = vsyncpa [#allocation7], 1
    %192 = vsyncpa [#allocation5], 1

</llo_original>
